<compile_context>
chip_gen: v5e
topology: v5e:2x2
jax: 0.10.0
libtpu: 0.0.40
codegen_flags: <defaults>
</compile_context>

<pallas_src>
import math
import time
from functools import partial

import jax
import jax.numpy as jnp
from jax.experimental import pallas as pl
from jax.experimental.pallas import tpu as pltpu

_LANES = 128
_MAX_TILE_ROWS = 8192     # (8192, 128) f32 tile = 4 MiB; <= ~24 MiB VMEM double-buffered.
_VMEM_LIMIT = 48 << 20    # fits v5e/v6e scoped VMEM and v7x's 64 MiB physical VMEM.
_SMALL_N = 1 << 16        # below this, a fused XLA kernel beats pallas_call overhead.


def _make_kernel(tile_rows, total_rows, needs_mask):
    def kernel(pred_ref, oracle_ref, loss_ref, psum_ref):
        # Cast inside the kernel (VPU work hidden under the DMA); accumulate in f32.
        diff = pred_ref[...].astype(jnp.float32) - oracle_ref[...].astype(jnp.float32)
        sq = diff * diff
        # nn.MSELoss(reduce=False) elementwise tile.
        loss_ref[...] = sq.astype(loss_ref.dtype)
        if needs_mask:
            # Boundary tile: rows past `total_rows` hold stale VMEM data.  The
            # elementwise writeback is masked by Pallas, but the partial sum must
            # be masked explicitly.
            base = pl.program_id(0) * tile_rows
            row_ids = base + jax.lax.broadcasted_iota(jnp.int32, sq.shape, 0)
            sq = jnp.where(row_ids < total_rows, sq, 0.0)
        # Lane-dense per-tile partial sum, placed in sublane 0 of an (8, 128) block
        # so the psum out_spec is layout-legal on all chips (no (1,128) sub-sublane
        # output blocks).
        col_sums = jnp.sum(sq, axis=0, keepdims=True)                # (1, 128) f32
        sub = jax.lax.broadcasted_iota(jnp.int32, (8, _LANES), 0)
        psum_ref[0] = jnp.where(sub == 0, col_sums, 0.0)
    return kernel


def _pallas_path(pred2, oracle2, out_dtype, rows):
    if rows <= _MAX_TILE_ROWS:
        tile_rows = rows               # full-extent block: always layout-legal
        needs_mask = False
    else:
        tile_rows = _MAX_TILE_ROWS     # multiple of 32: legal for f32/bf16/int8
        needs_mask = (rows % tile_rows) != 0
    num_tiles = -(-rows // tile_rows)

    kernel = _make_kernel(tile_rows, rows, needs_mask)
    loss2, psums = pl.pallas_call(
        kernel,
        out_shape=(
            jax.ShapeDtypeStruct((rows, _LANES), out_dtype),
            jax.ShapeDtypeStruct((num_tiles, 8, _LANES), jnp.float32),
        ),
        grid=(num_tiles,),
        in_specs=[
            pl.BlockSpec((tile_rows, _LANES), lambda i: (i, 0)),
            pl.BlockSpec((tile_rows, _LANES), lambda i: (i, 0)),
        ],
        out_specs=(
            pl.BlockSpec((tile_rows, _LANES), lambda i: (i, 0)),
            pl.BlockSpec((1, 8, _LANES), lambda i: (i, 0, 0)),
        ),
        compiler_params=pltpu.CompilerParams(
            dimension_semantics=("parallel",),
            vmem_limit_bytes=_VMEM_LIMIT,
        ),
    )(pred2, oracle2)
    return loss2, psums


@partial(jax.jit, static_argnames=("force_pallas",))
def simple_critic_loss(pred, oracle, force_pallas=False):
    """Element-wise MSE (reduce=False) plus its global mean, in one fused dispatch.

    Returns (loss, mean): `loss` has pred's shape, `mean` is an f32 device scalar.
    """
    assert pred.shape == oracle.shape, (pred.shape, oracle.shape)
    orig_shape = pred.shape
    out_dtype = jnp.result_type(pred.dtype, oracle.dtype)
    n = int(math.prod(orig_shape))

    use_pallas = (n > 0) and (n % _LANES == 0) and (force_pallas or n >= _SMALL_N)
    if use_pallas:
        rows = n // _LANES
        pred2 = pred.reshape(rows, _LANES)      # free reshape: no pad, no copy
        oracle2 = oracle.reshape(rows, _LANES)
        loss2, psums = _pallas_path(pred2, oracle2, out_dtype, rows)
        loss = loss2.reshape(orig_shape)
        mean = jnp.sum(psums) / jnp.float32(n)  # tiny reduction, fuses under jit
        return loss, mean

    # Small or lane-ragged inputs: a fused XLA elementwise kernel is already at the
    # HBM roofline, and avoids the pad+slice copies a Pallas path would require.
    # TODO(synk): large tensors whose flat size is not a multiple of 128 also take
    # this XLA route rather than a 1-D-blocked Pallas path.
    diff = pred.astype(jnp.float32) - oracle.astype(jnp.float32)
    sq = diff * diff
    loss = sq.astype(out_dtype)
    if n == 0:
        mean = jnp.float32(float("nan"))
    else:
        mean = jnp.sum(sq) / jnp.float32(n)
    return loss, mean


class RLStatistics:
    """Minimal port of the RL stats accumulator used by SimpleCriticLoss.

    `loss` may be a JAX device scalar; host conversion (float()) is deferred to the
    reporting helpers so the training step never blocks on a device-to-host sync.
    """

    def __init__(self, loss=0.0, reward=0.0, n_words=0):
        self.loss = loss
        self.n_words = n_words
        self.n_src_words = 0
        self.reward = reward
        self.start_time = time.time()

    def update(self, stat):
        self.loss += stat.loss  # stays on-device if both are device scalars
        self.n_words += stat.n_words
        self.reward += stat.reward

    def mean_loss(self):
        return float(self.loss) / self.n_words

    def mean_reward(self):
        return float(self.reward) / self.n_words

    def elapsed_time(self):
        return time.time() - self.start_time

    def ppl(self):
        return math.exp(min(float(self.loss) / self.n_words, 100))

    def str_loss(self):
        return 'loss: %6.4f reward: %6.4f;' % (self.mean_loss(), self.mean_reward())


class SimpleCriticLossPallas:
    """forward(pred, oracle, pmask=None) -> (elementwise_loss, RLStatistics)."""

    def __call__(self, pred, oracle, pmask=None):
        # pmask is unused by the original SimpleCriticLoss as well.
        loss, mean = simple_critic_loss(pred, oracle)
        # Keep the mean on-device; RLStatistics converts lazily when reporting.
        stats = RLStatistics(loss=mean, n_words=pred.shape[0])
        return loss, stats


if __name__ == "__main__":
    key = jax.random.PRNGKey(0)
    k1, k2, k3, k4, k5, k6, k7, k8 = jax.random.split(key, 8)
    module = SimpleCriticLossPallas()

    # Case 1: small, lane-aligned f32 -> forced through the Pallas kernel.
    p1 = jax.random.normal(k1, (8, 128), dtype=jnp.float32)
    o1 = jax.random.normal(k2, (8, 128), dtype=jnp.float32)
    l1, m1 = simple_critic_loss(p1, o1, force_pallas=True)
    l1 = jax.block_until_ready(l1)
    ref1 = (p1 - o1) ** 2
    assert jnp.allclose(l1, ref1, atol=1e-5), "case1 elementwise mismatch"
    assert abs(float(m1) - float(ref1.mean())) < 1e-5, "case1 mean mismatch"

    # Case 2: bf16 inputs -> Pallas kernel with 16-sublane packed tiles.
    p2 = jax.random.normal(k3, (48, 128), dtype=jnp.bfloat16)
    o2 = jax.random.normal(k4, (48, 128), dtype=jnp.bfloat16)
    l2, m2 = simple_critic_loss(p2, o2, force_pallas=True)
    l2 = jax.block_until_ready(l2)
    ref2 = (p2.astype(jnp.float32) - o2.astype(jnp.float32)) ** 2
    assert jnp.allclose(l2.astype(jnp.float32), ref2, atol=1e-2, rtol=1e-2), \
        "case2 elementwise mismatch"
    assert abs(float(m2) - float(ref2.mean())) < 1e-2, "case2 mean mismatch"

    # Case 3: multi-tile with ragged row remainder (exercises in-kernel boundary
    # masking); routed to Pallas automatically (128-aligned and above _SMALL_N).
    rows3 = _MAX_TILE_ROWS + 8
    p3 = jax.random.normal(k5, (rows3, 128), dtype=jnp.float32)
    o3 = jax.random.normal(k6, (rows3, 128), dtype=jnp.float32)
    l3, m3 = simple_critic_loss(p3, o3)
    l3 = jax.block_until_ready(l3)
    ref3 = (p3 - o3) ** 2
    assert jnp.allclose(l3, ref3, atol=1e-5), "case3 elementwise mismatch"
    assert abs(float(m3) - float(ref3.mean())) < 1e-4, "case3 mean mismatch"

    # Case 4: typical critic head [batch, 1] through the module wrapper
    # (small + lane-ragged -> fused XLA fallback path + RLStatistics).
    p4 = jax.random.normal(k7, (37, 1), dtype=jnp.float32)
    o4 = jax.random.normal(k8, (37, 1), dtype=jnp.float32)
    l4, stats4 = module(p4, o4)
    l4 = jax.block_until_ready(l4)
    ref4 = (p4 - o4) ** 2
    assert jnp.allclose(l4, ref4, atol=1e-6), "case4 elementwise mismatch"
    assert abs(float(stats4.loss) - float(ref4.mean())) < 1e-6, "case4 mean mismatch"
    assert stats4.n_words == 37

    print("KERNEL_OK")
</pallas_src>

<mosaic_0001>
module attributes {stable_mosaic.version = 11 : i64} {
  func.func @kernel(%arg0: i32, %arg1: memref<8x128xf32, #tpu.memory_space<vmem>>, %arg2: memref<8x128xf32, #tpu.memory_space<vmem>>, %arg3: memref<8x128xf32, #tpu.memory_space<vmem>>, %arg4: memref<1x8x128xf32, #tpu.memory_space<vmem>>) attributes {dimension_semantics = [#tpu.dimension_semantics<parallel>], iteration_bounds = array<i64: 1>, scalar_prefetch = 0 : i64, scratch_operands = 0 : i64, tpu.core_type = #tpu.core_type<tc>, window_params = [{transform_indices = @transform_0, window_bounds = array<i64: 8, 128>}, {transform_indices = @transform_1, window_bounds = array<i64: 8, 128>}, {transform_indices = @transform_2, window_bounds = array<i64: 8, 128>}, {transform_indices = @transform_3, window_bounds = array<i64: 1, 8, 128>}]} {
    %c0 = arith.constant 0 : index
    %c0_0 = arith.constant 0 : index
    %0 = vector.load %arg1[%c0, %c0_0] : memref<8x128xf32, #tpu.memory_space<vmem>>, vector<8x128xf32>
    %c0_1 = arith.constant 0 : index
    %c0_2 = arith.constant 0 : index
    %1 = vector.load %arg2[%c0_1, %c0_2] : memref<8x128xf32, #tpu.memory_space<vmem>>, vector<8x128xf32>
    %2 = arith.subf %0, %1 : vector<8x128xf32>
    %3 = arith.mulf %2, %2 : vector<8x128xf32>
    %c0_3 = arith.constant 0 : index
    %c0_4 = arith.constant 0 : index
    %4 = vector.load %arg3[%c0_3, %c0_4] : memref<8x128xf32, #tpu.memory_space<vmem>>, vector<8x128xf32>
    tpu.vector_store %arg3[%c0_3, %c0_4], %3 {strides = array<i32>} : memref<8x128xf32, #tpu.memory_space<vmem>>, vector<8x128xf32>,
    %cst = arith.constant dense<0.000000e+00> : vector<128xf32>
    %5 = vector.multi_reduction <add>, %3, %cst [0] : vector<8x128xf32> to vector<128xf32>
    %6 = vector.shape_cast %5 : vector<128xf32> to vector<1x128xf32>
    %7 = tpu.iota {dimensions = array<i32: 0>} : vector<8x128xi32>
    %c0_i32 = arith.constant 0 : i32
    %8 = vector.broadcast %c0_i32 : i32 to vector<8x128xi32>
    %9 = arith.cmpi eq, %7, %8 : vector<8x128xi32>
    %cst_5 = arith.constant 0.000000e+00 : f32
    %10 = vector.shape_cast %6 : vector<1x128xf32> to vector<1x128xf32>
    %11 = vector.broadcast %10 : vector<1x128xf32> to vector<8x128xf32>
    %12 = vector.broadcast %cst_5 : f32 to vector<8x128xf32>
    %13 = arith.select %9, %11, %12 : vector<8x128xi1>, vector<8x128xf32>
    %c0_6 = arith.constant 0 : index
    %c0_7 = arith.constant 0 : index
    %c0_8 = arith.constant 0 : index
    %14 = vector.load %arg4[%c0_6, %c0_7, %c0_8] : memref<1x8x128xf32, #tpu.memory_space<vmem>>, vector<1x8x128xf32>
    %15 = vector.shape_cast %14 : vector<1x8x128xf32> to vector<8x128xf32>
    %16 = vector.shape_cast %13 : vector<8x128xf32> to vector<1x8x128xf32>
    tpu.vector_store %arg4[%c0_6, %c0_7, %c0_8], %16 {strides = array<i32>} : memref<1x8x128xf32, #tpu.memory_space<vmem>>, vector<1x8x128xf32>,
    return
  }
  func.func @transform_0(%arg0: i32) -> (i32, i32) {
    %c0_i32 = arith.constant 0 : i32
    %c0_i32_0 = arith.constant 0 : i32
    return %arg0, %c0_i32 : i32, i32
  }
  func.func @transform_1(%arg0: i32) -> (i32, i32) {
    %c0_i32 = arith.constant 0 : i32
    %c0_i32_0 = arith.constant 0 : i32
    return %arg0, %c0_i32 : i32, i32
  }
  func.func @transform_2(%arg0: i32) -> (i32, i32) {
    %c0_i32 = arith.constant 0 : i32
    %c0_i32_0 = arith.constant 0 : i32
    return %arg0, %c0_i32 : i32, i32
  }
  func.func @transform_3(%arg0: i32) -> (i32, i32, i32) {
    %c0_i32 = arith.constant 0 : i32
    %c0_i32_0 = arith.constant 0 : i32
    %c0_i32_1 = arith.constant 0 : i32
    return %arg0, %c0_i32, %c0_i32_0 : i32, i32, i32
  }
}

</mosaic_0001>

<llo_original>
// kernel: simple_critic_loss.1
$region0: #{simple_critic_loss.1}
  #allocation0 [shape = 'u32[]', space=smem, size = 0x4, offset = 0x4, fixed_abs, tag = 'smem constant byte address 0x4 - core index']
  #allocation1 [shape = 'u32[72,128]{1,0:T(1,128)}', space=vmem, size = 0x9000, scoped, tag = 'internal scratch']
  %s0 = inlined_call_operand.hbm [shape: f32[8,128], index: 0, kind: input, shape index: {}]
  %s1 = inlined_call_operand.hbm [shape: f32[8,128], index: 1, kind: input, shape index: {}]
  %s2 = inlined_call_operand.hbm [shape: f32[8,128], index: 2, kind: output, shape index: {0}]
  %s3 = inlined_call_operand.vmem [shape: f32[1,8,128], index: 3, kind: output, shape index: {1}]
  %4 = xla_tuple %s2, %s3
  %s5 = sld [smem:[#allocation0]]
  $region34: #{simple_critic_loss.1} parent=0
    _
  %s7 = ssub.s32 1, %s5
  %s8 = scalar_select 0, %s7, %s5
  $region1: #{simple_critic_loss.1} parent=0
    #allocation2 [shape = 'u8[4096]{0}', space=vmem, size = 0x1000, scoped, tag = 'input window, operand 0, single buffered']
    #allocation3 [shape = 's32[1]{0}', space=sflag, size = 0x4, scoped, tag = 'scoped memory for simple_critic_loss.1']
    #allocation4 [shape = 's32[1]{0}', space=sflag, size = 0x4, scoped, tag = 'scoped memory for simple_critic_loss.1']
    #allocation5 [shape = 'u8[4096]{0}', space=vmem, size = 0x1000, scoped, tag = 'input window, operand 1, single buffered']
    #allocation6 [shape = 's32[1]{0}', space=sflag, size = 0x4, scoped, tag = 'scoped memory for simple_critic_loss.1']
    #allocation7 [shape = 'u8[4096]{0}', space=vmem, size = 0x1000, scoped, tag = 'output window, operand 0, single buffered']
    %9 = vsyncpa [#allocation3], 0
    %10 = vsyncpa [#allocation6], 0
    %11 = vsyncpa [#allocation4], 0
    // Predicated region
    $region2: #{simple_critic_loss.1} parent=1 // pred_check
      _
    $region3: #{simple_critic_loss.1} parent=1 // pred_check_branch
      %13 = sbr.rel (0) target = $region5
    $region4: #{simple_critic_loss.1} parent=1 // pred_region
      %15 = vsyncadd [#allocation3], 0
      %s17 = sshll.u32 %s0, 4
      %s18 = int_to_ptr.hbm [resolvable:$true] %s17
      %s19 = sshll.u32 [#allocation2], 4
      %s20 = int_to_ptr.vmem [resolvable:$true] %s19
      %22 = dma.hbm_to_vmem [thread:$0]  %s18, 128, %s20, [#allocation3]
    $region5: #{simple_critic_loss.1} parent=1 // pred_fallthru
      _
    // Predicated region
    $region6: #{simple_critic_loss.1} parent=1 // pred_check
      _
    $region7: #{simple_critic_loss.1} parent=1 // pred_check_branch
      %24 = sbr.rel (0) target = $region9
    $region8: #{simple_critic_loss.1} parent=1 // pred_region
      %26 = vsyncadd [#allocation6], 0
      %s28 = sshll.u32 %s1, 4
      %s29 = int_to_ptr.hbm [resolvable:$true] %s28
      %s30 = sshll.u32 [#allocation5], 4
      %s31 = int_to_ptr.vmem [resolvable:$true] %s30
      %33 = dma.hbm_to_vmem [thread:$0]  %s29, 128, %s31, [#allocation6]
    $region9: #{simple_critic_loss.1} parent=1 // pred_fallthru
      _
    // Predicated region
    $region10: #{simple_critic_loss.1} parent=1 // pred_check
      _
    $region11: #{simple_critic_loss.1} parent=1 // pred_check_branch
      %35 = sbr.rel (0) target = $region13
    $region12: #{simple_critic_loss.1} parent=1 // pred_region
      %37 = dma.done [#allocation3], 128
    $region13: #{simple_critic_loss.1} parent=1 // pred_fallthru
      _
    // Predicated region
    $region14: #{simple_critic_loss.1} parent=1 // pred_check
      _
    $region15: #{simple_critic_loss.1} parent=1 // pred_check_branch
      %39 = sbr.rel (0) target = $region17
    $region16: #{simple_critic_loss.1} parent=1 // pred_region
      %41 = dma.done [#allocation6], 128
    $region17: #{simple_critic_loss.1} parent=1 // pred_fallthru
      _
    %v42 = vld [vmem:[#allocation2] sm:$0xff]
    %v43 = vld [vmem:[#allocation5] sm:$0xff]
    %v44 = vsub.f32 %v42, %v43
    %v45 = vmul.f32 %v44, %v44
    %46 = vst [vmem:[#allocation7] sm:$0xff] %v45
    %v47 = vrot.slane %v45, 4
    %v48 = vadd.f32 %v45, %v47
    %v49 = vrot.slane %v48, 2
    %v50 = vadd.f32 %v48, %v49
    %v51 = vrot.slane %v50, 1
    %v52 = vadd.f32 %v50, %v51
    %v53 = vlaneseq
    %v54 = vshrl.u32 %v53, 7
    %vm55 = vcmp.eq.s32.totalorder %v54, 0
    %v56 = vsel %vm55, %v52, 0.0
    %57 = vst [vmem:[%s3] sm:$0xff] %v56
    // Predicated region
    $region18: #{simple_critic_loss.1} parent=1 // pred_check
      _
    $region19: #{simple_critic_loss.1} parent=1 // pred_check_branch
      %59 = sbr.rel (0) target = $region21
    $region20: #{simple_critic_loss.1} parent=1 // pred_region
      %61 = vsyncadd [#allocation4], 0
      %s63 = sshll.u32 [#allocation7], 4
      %s64 = int_to_ptr.vmem [resolvable:$true] %s63
      %s65 = sshll.u32 %s2, 4
      %s66 = int_to_ptr.hbm [resolvable:$true] %s65
      %68 = dma.vmem_to_hbm [thread:$0]  %s64, 128, %s66, [#allocation4]
    $region21: #{simple_critic_loss.1} parent=1 // pred_fallthru
      _
    // Predicated region
    $region22: #{simple_critic_loss.1} parent=1 // pred_check
      _
    $region23: #{simple_critic_loss.1} parent=1 // pred_check_branch
      %70 = sbr.rel (0) target = $region25
    $region24: #{simple_critic_loss.1} parent=1 // pred_region
      _
    $region25: #{simple_critic_loss.1} parent=1 // pred_fallthru
      _
    // Predicated region
    $region26: #{simple_critic_loss.1} parent=1 // pred_check
      _
    $region27: #{simple_critic_loss.1} parent=1 // pred_check_branch
      %72 = sbr.rel (0) target = $region29
    $region28: #{simple_critic_loss.1} parent=1 // pred_region
      %74 = dma.done [#allocation4], 128
    $region29: #{simple_critic_loss.1} parent=1 // pred_fallthru
      _
    // Predicated region
    $region30: #{simple_critic_loss.1} parent=1 // pred_check
      _
    $region31: #{simple_critic_loss.1} parent=1 // pred_check_branch
      %76 = sbr.rel (0) target = $region33
    $region32: #{simple_critic_loss.1} parent=1 // pred_region
      _
    $region33: #{simple_critic_loss.1} parent=1 // pred_fallthru
      _
    %77 = vsyncpa [#allocation3], 1
    %78 = vsyncpa [#allocation6], 1
    %79 = vsyncpa [#allocation4], 1

</llo_original>
